<compile_context>
chip_gen: v7x
topology: tpu7x:2x2x1
jax: 0.10.0
libtpu: 0.0.40
codegen_flags: <defaults>
</compile_context>

<pallas_src>
import jax
import jax.numpy as jnp
import numpy as np
from jax.experimental import pallas as pl
from jax.experimental.pallas import tpu as pltpu


def _disc_kernel(s1_ref, s2_ref, w1_ref, b1_ref, w2_ref, b2_ref, out_ref):
    """Fused bidirectional discriminator forward (eval mode).

    s1_ref, s2_ref : [TB, E]   f32/input dtype  sentence embeddings (batch tile)
    w1_ref         : [Kp, Np]  bf16             fused fc1 weight (fwd | bwd), padded
    b1_ref         : [1, Np]   f32              fused fc1 bias, padded with zeros
    w2_ref         : [1, Np]   f32              fused fc2 weight row, pre-scaled by 0.5
    b2_ref         : [1, 1]    f32              0.5 * (b2_fwd + b2_bwd)
    out_ref        : [TB, 1]   f32
    """
    s1 = s1_ref[...].astype(jnp.float32)
    s2 = s2_ref[...].astype(jnp.float32)

    diff = s1 - s2
    prod = s1 * s2
    adiff = jnp.abs(diff)

    tb, e = s1.shape
    kp = w1_ref.shape[0]
    feats = [s1, s2, diff, prod, adiff]
    k_pad = kp - 5 * e                     # static (shape-derived)
    if k_pad > 0:
        feats.append(jnp.zeros((tb, k_pad), jnp.float32))

    # X = [s1 | s2 | s1-s2 | s1*s2 | |s1-s2| | 0-pad]  ->  [TB, Kp], bf16 MXU operand
    x = jnp.concatenate(feats, axis=-1).astype(jnp.bfloat16)

    # TODO(synk): dropout (input 0.6 / hidden 0.3) is identity here (eval mode only).
    # Single fc1 matmul covering BOTH directions; f32 accumulation on the MXU.
    h = jnp.dot(x, w1_ref[...], preferred_element_type=jnp.float32) + b1_ref[...]
    h = jnp.maximum(h, 0.0)                # ReLU

    # fc2 (output width 1): VPU multiply + lane reduce; 0.5 averaging already folded
    # into w2/b2 on the host.
    score = jnp.sum(h * w2_ref[...], axis=-1, keepdims=True) + b2_ref[...]
    out_ref[...] = score.astype(out_ref.dtype)


def mlp_discriminator(s1, s2, params, *, batch_tile=512):
    """params: dict with fused/padded 'w1' [Kp,Np] bf16, 'b1' [1,Np], 'w2' [1,Np], 'b2' [1,1]."""
    B, E = s1.shape
    w1, b1, w2, b2 = params["w1"], params["b1"], params["w2"], params["b2"]
    Kp, Np = w1.shape

    TB = B if B <= batch_tile else batch_tile          # batch_tile is a multiple of 8
    grid = (pl.cdiv(B, TB),)

    row_spec = pl.BlockSpec((TB, E), lambda i: (i, 0))
    # Constant index_maps -> weights fetched from HBM once, VMEM-resident across tiles.
    w1_spec = pl.BlockSpec((Kp, Np), lambda i: (0, 0))
    b1_spec = pl.BlockSpec((1, Np), lambda i: (0, 0))
    w2_spec = pl.BlockSpec((1, Np), lambda i: (0, 0))
    b2_spec = pl.BlockSpec((1, 1), lambda i: (0, 0))

    return pl.pallas_call(
        _disc_kernel,
        out_shape=jax.ShapeDtypeStruct((B, 1), jnp.float32),
        grid_spec=pltpu.PrefetchScalarGridSpec(
            num_scalar_prefetch=0,
            grid=grid,
            in_specs=[row_spec, row_spec, w1_spec, b1_spec, w2_spec, b2_spec],
            out_specs=pl.BlockSpec((TB, 1), lambda i: (i, 0)),
        ),
        compiler_params=pltpu.CompilerParams(
            dimension_semantics=("parallel",)),
    )(s1, s2, w1, b1, w2, b2)


def init_raw_params(key, embed_dim, hidden):
    """Per-direction Linear params, nn.Linear-style uniform init.

    Weights stored as [in_features, out_features] (transpose of torch layout).
    """
    in_dim = embed_dim * 5
    ks = jax.random.split(key, 8)

    def lin(kw, kb, fan_in, fan_out):
        bound = 1.0 / np.sqrt(fan_in)
        w = jax.random.uniform(kw, (fan_in, fan_out), jnp.float32, -bound, bound)
        b = jax.random.uniform(kb, (fan_out,), jnp.float32, -bound, bound)
        return w, b

    w1f, b1f = lin(ks[0], ks[1], in_dim, hidden)
    w2f, b2f = lin(ks[2], ks[3], hidden, 1)
    w1b, b1b = lin(ks[4], ks[5], in_dim, hidden)
    w2b, b2b = lin(ks[6], ks[7], hidden, 1)
    return dict(w1f=w1f, b1f=b1f, w2f=w2f, b2f=b2f,
                w1b=w1b, b1b=b1b, w2b=w2b, b2b=b2b)


def prepare_params(raw, embed_dim, hidden):
    """Host-side (one-time) weight fusion + padding; zero kernel cost."""
    E, H = embed_dim, hidden
    K = 5 * E
    Kp = pl.cdiv(K, 128) * 128         # contraction dim padded to MXU-friendly depth
    N = 2 * H
    Np = pl.cdiv(N, 128) * 128         # hidden (both directions) padded to lane width

    w1f, w1b = raw["w1f"], raw["w1b"]
    # Re-order backward fc1 row blocks to the forward feature layout
    # [s1, s2, s1-s2, s1*s2, |s1-s2|]: backward input is [s2, s1, s2-s1, prod, adiff],
    # so swap the first two blocks and negate the diff block.
    w1b_re = jnp.concatenate(
        [w1b[E:2 * E], w1b[:E], -w1b[2 * E:3 * E], w1b[3 * E:4 * E], w1b[4 * E:]],
        axis=0)
    w1c = jnp.concatenate([w1f, w1b_re], axis=1)           # [K, 2H]
    w1c = jnp.pad(w1c, ((0, Kp - K), (0, Np - N)))          # zero-pad -> [Kp, Np]

    b1c = jnp.concatenate([raw["b1f"], raw["b1b"]])          # [2H]
    b1c = jnp.pad(b1c, (0, Np - N)).reshape(1, Np)           # padded bias cols = 0

    w2c = 0.5 * jnp.concatenate([raw["w2f"][:, 0], raw["w2b"][:, 0]])  # fold the /2
    w2c = jnp.pad(w2c, (0, Np - N)).reshape(1, Np)           # padded fc2 rows = 0

    b2c = (0.5 * (raw["b2f"] + raw["b2b"])).reshape(1, 1)

    return {
        "w1": w1c.astype(jnp.bfloat16),   # bf16 MXU operand (f32 accumulate in-kernel)
        "b1": b1c.astype(jnp.float32),
        "w2": w2c.astype(jnp.float32),
        "b2": b2c.astype(jnp.float32),
    }


def reference(s1, s2, raw, *, bf16_matmul):
    """Pure-JAX replica of MLP_Discriminator.forward (eval mode)."""
    def mlp_ref(x, w1, b1, w2, b2):
        if bf16_matmul:
            h = jnp.dot(x.astype(jnp.bfloat16), w1.astype(jnp.bfloat16),
                        preferred_element_type=jnp.float32) + b1
        else:
            h = x @ w1 + b1
        h = jnp.maximum(h, 0.0)
        return h @ w2 + b2

    fwd = jnp.concatenate([s1, s2, s1 - s2, s1 * s2, jnp.abs(s1 - s2)], -1)
    bwd = jnp.concatenate([s2, s1, s2 - s1, s1 * s2, jnp.abs(s1 - s2)], -1)
    sf = mlp_ref(fwd, raw["w1f"], raw["b1f"], raw["w2f"], raw["b2f"])
    sb = mlp_ref(bwd, raw["w1b"], raw["b1b"], raw["w2b"], raw["b2b"])
    return (sf + sb) / 2.0


if __name__ == "__main__":
    # Small module-consistent shapes: embed_dim=32 (constructor arg),
    # hidden_state=500 (hard-coded in MLP_Discriminator), n_class=1, bidirectional.
    B, E, H = 8, 32, 500

    key = jax.random.PRNGKey(0)
    k1, k2, kp = jax.random.split(key, 3)
    s1 = jax.random.normal(k1, (B, E), jnp.float32)
    s2 = jax.random.normal(k2, (B, E), jnp.float32)

    raw = init_raw_params(kp, E, H)
    params = prepare_params(raw, E, H)

    out = mlp_discriminator(s1, s2, params)
    out = jax.block_until_ready(out)
    assert out.shape == (B, 1), out.shape

    # 1) Reference with the same fc1 operand precision (bf16) as the kernel.
    ref_bf16 = reference(s1, s2, raw, bf16_matmul=True)
    np.testing.assert_allclose(np.asarray(out), np.asarray(ref_bf16),
                               rtol=1e-3, atol=1e-3)
    # 2) Full-f32 reference (PyTorch eval semantics) with bf16-level tolerance.
    ref_f32 = reference(s1, s2, raw, bf16_matmul=False)
    np.testing.assert_allclose(np.asarray(out), np.asarray(ref_f32),
                               rtol=5e-2, atol=5e-2)

    print("KERNEL_OK")
</pallas_src>

<mosaic_0001>
module attributes {stable_mosaic.version = 11 : i64} {
  func.func @_disc_kernel(%arg0: i32, %arg1: memref<8x32xf32, #tpu.memory_space<vmem>>, %arg2: memref<8x32xf32, #tpu.memory_space<vmem>>, %arg3: memref<256x1024xbf16, #tpu.memory_space<vmem>>, %arg4: memref<1x1024xf32, #tpu.memory_space<vmem>>, %arg5: memref<1x1024xf32, #tpu.memory_space<vmem>>, %arg6: memref<1x1xf32, #tpu.memory_space<vmem>>, %arg7: memref<8x1xf32, #tpu.memory_space<vmem>>) attributes {dimension_semantics = [#tpu.dimension_semantics<parallel>], iteration_bounds = array<i64: 1>, scalar_prefetch = 0 : i64, scratch_operands = 0 : i64, tpu.core_type = #tpu.core_type<tc>, window_params = [{transform_indices = @transform_0, window_bounds = array<i64: 8, 32>}, {transform_indices = @transform_1, window_bounds = array<i64: 8, 32>}, {pipeline_mode = #tpu.pipeline_mode<synchronous>, transform_indices = @transform_2, window_bounds = array<i64: 256, 1024>}, {pipeline_mode = #tpu.pipeline_mode<synchronous>, transform_indices = @transform_3, window_bounds = array<i64: 1, 1024>}, {pipeline_mode = #tpu.pipeline_mode<synchronous>, transform_indices = @transform_4, window_bounds = array<i64: 1, 1024>}, {pipeline_mode = #tpu.pipeline_mode<synchronous>, transform_indices = @transform_5, window_bounds = array<i64: 1, 1>}, {transform_indices = @transform_6, window_bounds = array<i64: 8, 1>}]} {
    %c0 = arith.constant 0 : index
    %c0_0 = arith.constant 0 : index
    %0 = vector.load %arg1[%c0, %c0_0] : memref<8x32xf32, #tpu.memory_space<vmem>>, vector<8x32xf32>
    %c0_1 = arith.constant 0 : index
    %c0_2 = arith.constant 0 : index
    %1 = vector.load %arg2[%c0_1, %c0_2] : memref<8x32xf32, #tpu.memory_space<vmem>>, vector<8x32xf32>
    %2 = arith.subf %0, %1 : vector<8x32xf32>
    %3 = arith.mulf %0, %1 : vector<8x32xf32>
    %4 = math.absf %2 : vector<8x32xf32>
    %cst = arith.constant 0.000000e+00 : f32
    %5 = vector.broadcast %cst : f32 to vector<8x96xf32>
    %6 = tpu.concatenate %0, %1, %2, %3, %4, %5 in 1 : vector<8x32xf32>, vector<8x32xf32>, vector<8x32xf32>, vector<8x32xf32>, vector<8x32xf32>, vector<8x96xf32> -> vector<8x256xf32>
    %7 = arith.truncf %6 : vector<8x256xf32> to vector<8x256xbf16>
    %c0_3 = arith.constant 0 : index
    %c0_4 = arith.constant 0 : index
    %8 = vector.load %arg3[%c0_3, %c0_4] : memref<256x1024xbf16, #tpu.memory_space<vmem>>, vector<256x1024xbf16>
    %cst_5 = arith.constant dense<0.000000e+00> : vector<8x1024xf32>
    %9 = tpu.matmul %7, %8, %cst_5 {dimension_numbers = #tpu.dot_dimension_numbers<[1], [0], [0], [1], [0, 0, 1, 1], [], []>} : vector<8x256xbf16>, vector<256x1024xbf16>, vector<8x1024xf32> -> vector<8x1024xf32>
    %c0_6 = arith.constant 0 : index
    %c0_7 = arith.constant 0 : index
    %10 = vector.load %arg4[%c0_6, %c0_7] : memref<1x1024xf32, #tpu.memory_space<vmem>>, vector<1x1024xf32>
    %11 = vector.broadcast %10 : vector<1x1024xf32> to vector<8x1024xf32>
    %12 = arith.addf %9, %11 : vector<8x1024xf32>
    %cst_8 = arith.constant 0.000000e+00 : f32
    %13 = vector.broadcast %cst_8 : f32 to vector<8x1024xf32>
    %14 = arith.maximumf %12, %13 : vector<8x1024xf32>
    %c0_9 = arith.constant 0 : index
    %c0_10 = arith.constant 0 : index
    %15 = vector.load %arg5[%c0_9, %c0_10] : memref<1x1024xf32, #tpu.memory_space<vmem>>, vector<1x1024xf32>
    %16 = vector.broadcast %15 : vector<1x1024xf32> to vector<8x1024xf32>
    %17 = arith.mulf %14, %16 : vector<8x1024xf32>
    %cst_11 = arith.constant dense<0.000000e+00> : vector<8xf32>
    %18 = vector.multi_reduction <add>, %17, %cst_11 [1] : vector<8x1024xf32> to vector<8xf32>
    %19 = vector.shape_cast %18 : vector<8xf32> to vector<8x1xf32>
    %c0_12 = arith.constant 0 : index
    %c0_13 = arith.constant 0 : index
    %20 = vector.load %arg6[%c0_12, %c0_13] : memref<1x1xf32, #tpu.memory_space<vmem>>, vector<1x1xf32>
    %21 = vector.broadcast %20 : vector<1x1xf32> to vector<8x1xf32>
    %22 = arith.addf %19, %21 : vector<8x1xf32>
    %c0_14 = arith.constant 0 : index
    %c0_15 = arith.constant 0 : index
    %23 = vector.load %arg7[%c0_14, %c0_15] : memref<8x1xf32, #tpu.memory_space<vmem>>, vector<8x1xf32>
    tpu.vector_store %arg7[%c0_14, %c0_15], %22 {strides = array<i32>} : memref<8x1xf32, #tpu.memory_space<vmem>>, vector<8x1xf32>,
    return
  }
  func.func @transform_0(%arg0: i32) -> (i32, i32) {
    %c0_i32 = arith.constant 0 : i32
    %c0_i32_0 = arith.constant 0 : i32
    return %arg0, %c0_i32 : i32, i32
  }
  func.func @transform_1(%arg0: i32) -> (i32, i32) {
    %c0_i32 = arith.constant 0 : i32
    %c0_i32_0 = arith.constant 0 : i32
    return %arg0, %c0_i32 : i32, i32
  }
  func.func @transform_2(%arg0: i32) -> (i32, i32) {
    %c0_i32 = arith.constant 0 : i32
    %c0_i32_0 = arith.constant 0 : i32
    %c0_i32_1 = arith.constant 0 : i32
    return %c0_i32, %c0_i32_0 : i32, i32
  }
  func.func @transform_3(%arg0: i32) -> (i32, i32) {
    %c0_i32 = arith.constant 0 : i32
    %c0_i32_0 = arith.constant 0 : i32
    %c0_i32_1 = arith.constant 0 : i32
    return %c0_i32, %c0_i32_0 : i32, i32
  }
  func.func @transform_4(%arg0: i32) -> (i32, i32) {
    %c0_i32 = arith.constant 0 : i32
    %c0_i32_0 = arith.constant 0 : i32
    %c0_i32_1 = arith.constant 0 : i32
    return %c0_i32, %c0_i32_0 : i32, i32
  }
  func.func @transform_5(%arg0: i32) -> (i32, i32) {
    %c0_i32 = arith.constant 0 : i32
    %c0_i32_0 = arith.constant 0 : i32
    %c0_i32_1 = arith.constant 0 : i32
    return %c0_i32, %c0_i32_0 : i32, i32
  }
  func.func @transform_6(%arg0: i32) -> (i32, i32) {
    %c0_i32 = arith.constant 0 : i32
    %c0_i32_0 = arith.constant 0 : i32
    return %arg0, %c0_i32 : i32, i32
  }
}

</mosaic_0001>

<llo_original>
// kernel: tpu_custom_call.1
$region0: #{tpu_custom_call.1}
  #allocation0 [shape = 'u32[]', space=smem, size = 0x4, offset = 0x4, fixed_abs, tag = 'smem constant byte address 0x4 - core index']
  #allocation1 [shape = 'u32[144,128]{1,0:T(1,128)}', space=vmem, size = 0x12000, scoped, tag = 'internal scratch']
  #allocation2 [shape = 'f32[1,1]{1,0:T(1,128)S(1)}', space=vmem, size = 0x200, scoped, tag = 'scoped memory for tpu_custom_call.1']
  %s0 = inlined_call_operand.hbm [shape: f32[8,32], index: 0, kind: input, shape index: {}]
  %s1 = inlined_call_operand.hbm [shape: f32[8,32], index: 1, kind: input, shape index: {}]
  %s2 = inlined_call_operand.hbm [shape: bf16[256,1024], index: 2, kind: input, shape index: {}]
  %s3 = inlined_call_operand.vmem [shape: f32[1,1024], index: 3, kind: input, shape index: {}]
  %s4 = inlined_call_operand.vmem [shape: f32[1,1024], index: 4, kind: input, shape index: {}]
  %s5 = inlined_call_operand.<no memory space> [shape: f32[1,1], index: 5, kind: input, shape index: {}]
  %s6 = inlined_call_operand.vmem [shape: f32[8,1], index: 6, kind: output, shape index: {}]
  %s7 = sld [smem:[#allocation0]]
  $region46: #{tpu_custom_call.1} parent=0
    _
  %s9 = ssub.s32 1, %s7
  %s10 = scalar_select 0, %s9, %s7
  %v11 = vstv %s5
  %12 = vst [vmem:[#allocation2] sm:$0x1] %v11
  $region1: #{tpu_custom_call.1} parent=0
    #allocation3 [shape = 'u8[4096]{0}', space=vmem, size = 0x1000, scoped, tag = 'input window, operand 0, single buffered']
    #allocation4 [shape = 's32[1]{0}', space=sflag, size = 0x4, scoped, tag = 'scoped memory for tpu_custom_call.1']
    #allocation5 [shape = 'u8[4096]{0}', space=vmem, size = 0x1000, scoped, tag = 'input window, operand 1, single buffered']
    #allocation6 [shape = 's32[1]{0}', space=sflag, size = 0x4, scoped, tag = 'scoped memory for tpu_custom_call.1']
    #allocation7 [shape = 'u8[524288]{0}', space=vmem, size = 0x80000, scoped, tag = 'input window, operand 2, single buffered']
    %13 = vsyncpa [#allocation4], 0
    %14 = vsyncpa [#allocation6], 0
    // Predicated region
    $region2: #{tpu_custom_call.1} parent=1 // pred_check
      _
    $region3: #{tpu_custom_call.1} parent=1 // pred_check_branch
      %16 = sbr.rel (0) target = $region5
    $region4: #{tpu_custom_call.1} parent=1 // pred_region
      %s18 = ssub.s32 128, 128
      %19 = vsyncadd [#allocation4], %s18
      %s21 = sshll.u32 [#allocation3], 4
      %s22 = int_to_ptr.vmem [resolvable:$true] %s21
      %24 = dma.hbm_to_vmem [thread:$0]  %s0, 128, %s22, [#allocation4]
    $region5: #{tpu_custom_call.1} parent=1 // pred_fallthru
      _
    // Predicated region
    $region6: #{tpu_custom_call.1} parent=1 // pred_check
      _
    $region7: #{tpu_custom_call.1} parent=1 // pred_check_branch
      %26 = sbr.rel (0) target = $region9
    $region8: #{tpu_custom_call.1} parent=1 // pred_region
      %s28 = ssub.s32 128, 128
      %29 = vsyncadd [#allocation6], %s28
      %s31 = sshll.u32 [#allocation5], 4
      %s32 = int_to_ptr.vmem [resolvable:$true] %s31
      %34 = dma.hbm_to_vmem [thread:$0]  %s1, 128, %s32, [#allocation6]
    $region9: #{tpu_custom_call.1} parent=1 // pred_fallthru
      _
    // Predicated region
    $region10: #{tpu_custom_call.1} parent=1 // pred_check
      _
    $region11: #{tpu_custom_call.1} parent=1 // pred_check_branch
      %36 = sbr.rel (0) target = $region13
    $region12: #{tpu_custom_call.1} parent=1 // pred_region
      %s38 = ssub.s32 16384, 16384
      %39 = vsyncadd [#allocation6], %s38
      %s40 = sshll.u32 [#allocation7], 4
      %s41 = int_to_ptr.vmem [resolvable:$true] %s40
      %46 = dma.hbm_to_vmem [thread:$0]  %s2, 16384, %s41, [#allocation6], 512, 512, 32
    $region13: #{tpu_custom_call.1} parent=1 // pred_fallthru
      _
    // Predicated region
    $region14: #{tpu_custom_call.1} parent=1 // pred_check
      _
    $region15: #{tpu_custom_call.1} parent=1 // pred_check_branch
      %48 = sbr.rel (0) target = $region17
    $region16: #{tpu_custom_call.1} parent=1 // pred_region
      _
    $region17: #{tpu_custom_call.1} parent=1 // pred_fallthru
      _
    // Predicated region
    $region18: #{tpu_custom_call.1} parent=1 // pred_check
      _
    $region19: #{tpu_custom_call.1} parent=1 // pred_check_branch
      %50 = sbr.rel (0) target = $region21
    $region20: #{tpu_custom_call.1} parent=1 // pred_region
      _
    $region21: #{tpu_custom_call.1} parent=1 // pred_fallthru
      _
    // Predicated region
    $region22: #{tpu_custom_call.1} parent=1 // pred_check
      _
    $region23: #{tpu_custom_call.1} parent=1 // pred_check_branch
      %52 = sbr.rel (0) target = $region25
    $region24: #{tpu_custom_call.1} parent=1 // pred_region
      _
    $region25: #{tpu_custom_call.1} parent=1 // pred_fallthru
      _
    // Predicated region
    $region26: #{tpu_custom_call.1} parent=1 // pred_check
      _
    $region27: #{tpu_custom_call.1} parent=1 // pred_check_branch
      %54 = sbr.rel (0) target = $region29
    $region28: #{tpu_custom_call.1} parent=1 // pred_region
      %55 = dma.done [#allocation4], 128
    $region29: #{tpu_custom_call.1} parent=1 // pred_fallthru
      _
    // Predicated region
    $region30: #{tpu_custom_call.1} parent=1 // pred_check
      _
    $region31: #{tpu_custom_call.1} parent=1 // pred_check_branch
      %57 = sbr.rel (0) target = $region33
    $region32: #{tpu_custom_call.1} parent=1 // pred_region
      %58 = dma.done [#allocation6], 128
    $region33: #{tpu_custom_call.1} parent=1 // pred_fallthru
      _
    // Predicated region
    $region34: #{tpu_custom_call.1} parent=1 // pred_check
      _
    $region35: #{tpu_custom_call.1} parent=1 // pred_check_branch
      %60 = sbr.rel (0) target = $region37
    $region36: #{tpu_custom_call.1} parent=1 // pred_region
      %61 = dma.done [#allocation6], 16384
    $region37: #{tpu_custom_call.1} parent=1 // pred_fallthru
      _
    %v62 = vld [vmem:[#allocation3] sm:$0xff]
    %v63 = vld [vmem:[#allocation5] sm:$0xff]
    %v64 = vsub.f32 %v62, %v63
    %v65 = vmul.f32 %v62, %v63
    %v66 = vand.u32 2147483647, %v64
    %68 = vrot.lane.b32.xlu0 %v63, 32
    %v69 = vpop.permute.xlu0 %68
    %72 = vrot.lane.b32.xlu0 %v64, 64
    %v73 = vpop.permute.xlu0 %72
    %76 = vrot.lane.b32.xlu0 %v65, 96
    %v77 = vpop.permute.xlu0 %76
    %vm79 = vcmask 261120
    %v80 = vsel %vm79, %v62, %v69
    %vm81 = vcmask 523264
    %v82 = vsel %vm81, %v80, %v73
    %vm83 = vcmask 785408
    %v84 = vsel %vm83, %v82, %v77
    %v85 = vsel %vm79, %v66, 0.0
    %v86 = vpack.c.bf16 %v84, %v84
    %v87 = vpack.c.bf16 %v85, %v85
    %v88 = vld [vmem:[#allocation7] sm:$0xff]
    %v89 = vld [vmem:[#allocation7 + $0x8] sm:$0xff]
    %v90 = vld [vmem:[#allocation7 + $0x10] sm:$0xff]
    %v91 = vld [vmem:[#allocation7 + $0x18] sm:$0xff]
    %v92 = vld [vmem:[#allocation7 + $0x20] sm:$0xff]
    %v93 = vld [vmem:[#allocation7 + $0x28] sm:$0xff]
    %v94 = vld [vmem:[#allocation7 + $0x30] sm:$0xff]
    %v95 = vld [vmem:[#allocation7 + $0x38] sm:$0xff]
    %v96 = vld [vmem:[#allocation7 + $0x40] sm:$0xff]
    %v97 = vld [vmem:[#allocation7 + $0x48] sm:$0xff]
    %v98 = vld [vmem:[#allocation7 + $0x50] sm:$0xff]
    %v99 = vld [vmem:[#allocation7 + $0x58] sm:$0xff]
    %v100 = vld [vmem:[#allocation7 + $0x60] sm:$0xff]
    %v101 = vld [vmem:[#allocation7 + $0x68] sm:$0xff]
    %v102 = vld [vmem:[#allocation7 + $0x70] sm:$0xff]
    %v103 = vld [vmem:[#allocation7 + $0x78] sm:$0xff]
    %v104 = vld [vmem:[#allocation7 + $0x80] sm:$0xff]
    %v105 = vld [vmem:[#allocation7 + $0x88] sm:$0xff]
    %v106 = vld [vmem:[#allocation7 + $0x90] sm:$0xff]
    %v107 = vld [vmem:[#allocation7 + $0x98] sm:$0xff]
    %v108 = vld [vmem:[#allocation7 + $0xa0] sm:$0xff]
    %v109 = vld [vmem:[#allocation7 + $0xa8] sm:$0xff]
    %v110 = vld [vmem:[#allocation7 + $0xb0] sm:$0xff]
    %v111 = vld [vmem:[#allocation7 + $0xb8] sm:$0xff]
    %v112 = vld [vmem:[#allocation7 + $0xc0] sm:$0xff]
    %v113 = vld [vmem:[#allocation7 + $0xc8] sm:$0xff]
    %v114 = vld [vmem:[#allocation7 + $0xd0] sm:$0xff]
    %v115 = vld [vmem:[#allocation7 + $0xd8] sm:$0xff]
    %v116 = vld [vmem:[#allocation7 + $0xe0] sm:$0xff]
    %v117 = vld [vmem:[#allocation7 + $0xe8] sm:$0xff]
    %v118 = vld [vmem:[#allocation7 + $0xf0] sm:$0xff]
    %v119 = vld [vmem:[#allocation7 + $0xf8] sm:$0xff]
    %v120 = vld [vmem:[#allocation7 + $0x100] sm:$0xff]
    %v121 = vld [vmem:[#allocation7 + $0x108] sm:$0xff]
    %v122 = vld [vmem:[#allocation7 + $0x110] sm:$0xff]
    %v123 = vld [vmem:[#allocation7 + $0x118] sm:$0xff]
    %v124 = vld [vmem:[#allocation7 + $0x120] sm:$0xff]
    %v125 = vld [vmem:[#allocation7 + $0x128] sm:$0xff]
    %v126 = vld [vmem:[#allocation7 + $0x130] sm:$0xff]
    %v127 = vld [vmem:[#allocation7 + $0x138] sm:$0xff]
    %v128 = vld [vmem:[#allocation7 + $0x140] sm:$0xff]
    %v129 = vld [vmem:[#allocation7 + $0x148] sm:$0xff]
    %v130 = vld [vmem:[#allocation7 + $0x150] sm:$0xff]
    %v131 = vld [vmem:[#allocation7 + $0x158] sm:$0xff]
    %v132 = vld [vmem:[#allocation7 + $0x160] sm:$0xff]
    %v133 = vld [vmem:[#allocation7 + $0x168] sm:$0xff]
    %v134 = vld [vmem:[#allocation7 + $0x170] sm:$0xff]
    %v135 = vld [vmem:[#allocation7 + $0x178] sm:$0xff]
    %v136 = vld [vmem:[#allocation7 + $0x180] sm:$0xff]
    %v137 = vld [vmem:[#allocation7 + $0x188] sm:$0xff]
    %v138 = vld [vmem:[#allocation7 + $0x190] sm:$0xff]
    %v139 = vld [vmem:[#allocation7 + $0x198] sm:$0xff]
    %v140 = vld [vmem:[#allocation7 + $0x1a0] sm:$0xff]
    %v141 = vld [vmem:[#allocation7 + $0x1a8] sm:$0xff]
    %v142 = vld [vmem:[#allocation7 + $0x1b0] sm:$0xff]
    %v143 = vld [vmem:[#allocation7 + $0x1b8] sm:$0xff]
    %v144 = vld [vmem:[#allocation7 + $0x1c0] sm:$0xff]
    %v145 = vld [vmem:[#allocation7 + $0x1c8] sm:$0xff]
    %v146 = vld [vmem:[#allocation7 + $0x1d0] sm:$0xff]
    %v147 = vld [vmem:[#allocation7 + $0x1d8] sm:$0xff]
    %v148 = vld [vmem:[#allocation7 + $0x1e0] sm:$0xff]
    %v149 = vld [vmem:[#allocation7 + $0x1e8] sm:$0xff]
    %v150 = vld [vmem:[#allocation7 + $0x1f0] sm:$0xff]
    %v151 = vld [vmem:[#allocation7 + $0x1f8] sm:$0xff]
    %v152 = vld [vmem:[#allocation7 + $0x200] sm:$0xff]
    %v153 = vld [vmem:[#allocation7 + $0x208] sm:$0xff]
    %v154 = vld [vmem:[#allocation7 + $0x210] sm:$0xff]
    %v155 = vld [vmem:[#allocation7 + $0x218] sm:$0xff]
    %v156 = vld [vmem:[#allocation7 + $0x220] sm:$0xff]
    %v157 = vld [vmem:[#allocation7 + $0x228] sm:$0xff]
    %v158 = vld [vmem:[#allocation7 + $0x230] sm:$0xff]
    %v159 = vld [vmem:[#allocation7 + $0x238] sm:$0xff]
    %v160 = vld [vmem:[#allocation7 + $0x240] sm:$0xff]
    %v161 = vld [vmem:[#allocation7 + $0x248] sm:$0xff]
    %v162 = vld [vmem:[#allocation7 + $0x250] sm:$0xff]
    %v163 = vld [vmem:[#allocation7 + $0x258] sm:$0xff]
    %v164 = vld [vmem:[#allocation7 + $0x260] sm:$0xff]
    %v165 = vld [vmem:[#allocation7 + $0x268] sm:$0xff]
    %v166 = vld [vmem:[#allocation7 + $0x270] sm:$0xff]
    %v167 = vld [vmem:[#allocation7 + $0x278] sm:$0xff]
    %v168 = vld [vmem:[#allocation7 + $0x280] sm:$0xff]
    %v169 = vld [vmem:[#allocation7 + $0x288] sm:$0xff]
    %v170 = vld [vmem:[#allocation7 + $0x290] sm:$0xff]
    %v171 = vld [vmem:[#allocation7 + $0x298] sm:$0xff]
    %v172 = vld [vmem:[#allocation7 + $0x2a0] sm:$0xff]
    %v173 = vld [vmem:[#allocation7 + $0x2a8] sm:$0xff]
    %v174 = vld [vmem:[#allocation7 + $0x2b0] sm:$0xff]
    %v175 = vld [vmem:[#allocation7 + $0x2b8] sm:$0xff]
    %v176 = vld [vmem:[#allocation7 + $0x2c0] sm:$0xff]
    %v177 = vld [vmem:[#allocation7 + $0x2c8] sm:$0xff]
    %v178 = vld [vmem:[#allocation7 + $0x2d0] sm:$0xff]
    %v179 = vld [vmem:[#allocation7 + $0x2d8] sm:$0xff]
    %v180 = vld [vmem:[#allocation7 + $0x2e0] sm:$0xff]
    %v181 = vld [vmem:[#allocation7 + $0x2e8] sm:$0xff]
    %v182 = vld [vmem:[#allocation7 + $0x2f0] sm:$0xff]
    %v183 = vld [vmem:[#allocation7 + $0x2f8] sm:$0xff]
    %v184 = vld [vmem:[#allocation7 + $0x300] sm:$0xff]
    %v185 = vld [vmem:[#allocation7 + $0x308] sm:$0xff]
    %v186 = vld [vmem:[#allocation7 + $0x310] sm:$0xff]
    %v187 = vld [vmem:[#allocation7 + $0x318] sm:$0xff]
    %v188 = vld [vmem:[#allocation7 + $0x320] sm:$0xff]
    %v189 = vld [vmem:[#allocation7 + $0x328] sm:$0xff]
    %v190 = vld [vmem:[#allocation7 + $0x330] sm:$0xff]
    %v191 = vld [vmem:[#allocation7 + $0x338] sm:$0xff]
    %v192 = vld [vmem:[#allocation7 + $0x340] sm:$0xff]
    %v193 = vld [vmem:[#allocation7 + $0x348] sm:$0xff]
    %v194 = vld [vmem:[#allocation7 + $0x350] sm:$0xff]
    %v195 = vld [vmem:[#allocation7 + $0x358] sm:$0xff]
    %v196 = vld [vmem:[#allocation7 + $0x360] sm:$0xff]
    %v197 = vld [vmem:[#allocation7 + $0x368] sm:$0xff]
    %v198 = vld [vmem:[#allocation7 + $0x370] sm:$0xff]
    %v199 = vld [vmem:[#allocation7 + $0x378] sm:$0xff]
    %v200 = vld [vmem:[#allocation7 + $0x380] sm:$0xff]
    %v201 = vld [vmem:[#allocation7 + $0x388] sm:$0xff]
    %v202 = vld [vmem:[#allocation7 + $0x390] sm:$0xff]
    %v203 = vld [vmem:[#allocation7 + $0x398] sm:$0xff]
    %v204 = vld [vmem:[#allocation7 + $0x3a0] sm:$0xff]
    %v205 = vld [vmem:[#allocation7 + $0x3a8] sm:$0xff]
    %v206 = vld [vmem:[#allocation7 + $0x3b0] sm:$0xff]
    %v207 = vld [vmem:[#allocation7 + $0x3b8] sm:$0xff]
    %v208 = vld [vmem:[#allocation7 + $0x3c0] sm:$0xff]
    %v209 = vld [vmem:[#allocation7 + $0x3c8] sm:$0xff]
    %v210 = vld [vmem:[#allocation7 + $0x3d0] sm:$0xff]
    %v211 = vld [vmem:[#allocation7 + $0x3d8] sm:$0xff]
    %v212 = vld [vmem:[#allocation7 + $0x3e0] sm:$0xff]
    %v213 = vld [vmem:[#allocation7 + $0x3e8] sm:$0xff]
    %v214 = vld [vmem:[#allocation7 + $0x3f0] sm:$0xff]
    %v215 = vld [vmem:[#allocation7 + $0x3f8] sm:$0xff]
    %v216 = vld [vmem:[%s3] sm:$0xff]
    %v218 = vlaneseq
    %v219 = vshrl.u32 %v218, 7
    %v220 = vsub.s32 0, %v219
    %v221 = vrot.slane %v216, %v220
    %v222 = vlaneseq
    %v223 = vshrl.u32 %v222, 7
    %v224 = vsub.s32 1, %v223
    %v225 = vrot.slane %v216, %v224
    %v226 = vlaneseq
    %v227 = vshrl.u32 %v226, 7
    %v228 = vsub.s32 2, %v227
    %v229 = vrot.slane %v216, %v228
    %v230 = vlaneseq
    %v231 = vshrl.u32 %v230, 7
    %v232 = vsub.s32 3, %v231
    %v233 = vrot.slane %v216, %v232
    %v234 = vlaneseq
    %v235 = vshrl.u32 %v234, 7
    %v236 = vsub.s32 4, %v235
    %v237 = vrot.slane %v216, %v236
    %v238 = vlaneseq
    %v239 = vshrl.u32 %v238, 7
    %v240 = vsub.s32 5, %v239
    %v241 = vrot.slane %v216, %v240
    %v242 = vlaneseq
    %v243 = vshrl.u32 %v242, 7
    %v244 = vsub.s32 6, %v243
    %v245 = vrot.slane %v216, %v244
    %v246 = vlaneseq
    %v247 = vshrl.u32 %v246, 7
    %v248 = vsub.s32 7, %v247
    %v249 = vrot.slane %v216, %v248
    %v386 = vunpack.c.l.b16 %v88
    %v387 = vunpack.c.h.b16 %v88
    %v388 = vunpack.c.l.b16 %v89
    %v389 = vunpack.c.h.b16 %v89
    %v390 = vunpack.c.l.b16 %v90
    %v391 = vunpack.c.h.b16 %v90
    %v392 = vunpack.c.l.b16 %v91
    %v393 = vunpack.c.h.b16 %v91
    %v394 = vunpack.c.l.b16 %v92
    %v395 = vunpack.c.h.b16 %v92
    %v396 = vunpack.c.l.b16 %v93
    %v397 = vunpack.c.h.b16 %v93
    %v398 = vunpack.c.l.b16 %v94
    %v399 = vunpack.c.h.b16 %v94
    %v400 = vunpack.c.l.b16 %v95
    %v401 = vunpack.c.h.b16 %v95
    %v402 = vunpack.c.l.b16 %v96
    %v403 = vunpack.c.h.b16 %v96
    %v404 = vunpack.c.l.b16 %v97
    %v405 = vunpack.c.h.b16 %v97
    %v406 = vunpack.c.l.b16 %v98
    %v407 = vunpack.c.h.b16 %v98
    %v408 = vunpack.c.l.b16 %v99
    %v409 = vunpack.c.h.b16 %v99
    %v410 = vunpack.c.l.b16 %v100
    %v411 = vunpack.c.h.b16 %v100
    %v412 = vunpack.c.l.b16 %v101
    %v413 = vunpack.c.h.b16 %v101
    %v414 = vunpack.c.l.b16 %v102
    %v415 = vunpack.c.h.b16 %v102
    %v416 = vunpack.c.l.b16 %v103
    %v417 = vunpack.c.h.b16 %v103
    %v418 = vunpack.c.l.b16 %v104
    %v419 = vunpack.c.h.b16 %v104
    %v420 = vunpack.c.l.b16 %v105
    %v421 = vunpack.c.h.b16 %v105
    %v422 = vunpack.c.l.b16 %v106
    %v423 = vunpack.c.h.b16 %v106
    %v424 = vunpack.c.l.b16 %v107
    %v425 = vunpack.c.h.b16 %v107
    %v426 = vunpack.c.l.b16 %v108
    %v427 = vunpack.c.h.b16 %v108
    %v428 = vunpack.c.l.b16 %v109
    %v429 = vunpack.c.h.b16 %v109
    %v430 = vunpack.c.l.b16 %v110
    %v431 = vunpack.c.h.b16 %v110
    %v432 = vunpack.c.l.b16 %v111
    %v433 = vunpack.c.h.b16 %v111
    %v434 = vunpack.c.l.b16 %v112
    %v435 = vunpack.c.h.b16 %v112
    %v436 = vunpack.c.l.b16 %v113
    %v437 = vunpack.c.h.b16 %v113
    %v438 = vunpack.c.l.b16 %v114
    %v439 = vunpack.c.h.b16 %v114
    %v440 = vunpack.c.l.b16 %v115
    %v441 = vunpack.c.h.b16 %v115
    %v442 = vunpack.c.l.b16 %v116
    %v443 = vunpack.c.h.b16 %v116
    %v444 = vunpack.c.l.b16 %v117
    %v445 = vunpack.c.h.b16 %v117
    %v446 = vunpack.c.l.b16 %v118
    %v447 = vunpack.c.h.b16 %v118
    %v448 = vunpack.c.l.b16 %v119
    %v449 = vunpack.c.h.b16 %v119
    %v450 = vunpack.c.l.b16 %v120
    %v451 = vunpack.c.h.b16 %v120
    %v452 = vunpack.c.l.b16 %v121
    %v453 = vunpack.c.h.b16 %v121
    %v454 = vunpack.c.l.b16 %v122
    %v455 = vunpack.c.h.b16 %v122
    %v456 = vunpack.c.l.b16 %v123
    %v457 = vunpack.c.h.b16 %v123
    %v458 = vunpack.c.l.b16 %v124
    %v459 = vunpack.c.h.b16 %v124
    %v460 = vunpack.c.l.b16 %v125
    %v461 = vunpack.c.h.b16 %v125
    %v462 = vunpack.c.l.b16 %v126
    %v463 = vunpack.c.h.b16 %v126
    %v464 = vunpack.c.l.b16 %v127
    %v465 = vunpack.c.h.b16 %v127
    %v466 = vunpack.c.l.b16 %v128
    %v467 = vunpack.c.h.b16 %v128
    %v468 = vunpack.c.l.b16 %v129
    %v469 = vunpack.c.h.b16 %v129
    %v470 = vunpack.c.l.b16 %v130
    %v471 = vunpack.c.h.b16 %v130
    %v472 = vunpack.c.l.b16 %v131
    %v473 = vunpack.c.h.b16 %v131
    %v474 = vunpack.c.l.b16 %v132
    %v475 = vunpack.c.h.b16 %v132
    %v476 = vunpack.c.l.b16 %v133
    %v477 = vunpack.c.h.b16 %v133
    %v478 = vunpack.c.l.b16 %v134
    %v479 = vunpack.c.h.b16 %v134
    %v480 = vunpack.c.l.b16 %v135
    %v481 = vunpack.c.h.b16 %v135
    %v482 = vunpack.c.l.b16 %v136
    %v483 = vunpack.c.h.b16 %v136
    %v484 = vunpack.c.l.b16 %v137
    %v485 = vunpack.c.h.b16 %v137
    %v486 = vunpack.c.l.b16 %v138
    %v487 = vunpack.c.h.b16 %v138
    %v488 = vunpack.c.l.b16 %v139
    %v489 = vunpack.c.h.b16 %v139
    %v490 = vunpack.c.l.b16 %v140
    %v491 = vunpack.c.h.b16 %v140
    %v492 = vunpack.c.l.b16 %v141
    %v493 = vunpack.c.h.b16 %v141
    %v494 = vunpack.c.l.b16 %v142
    %v495 = vunpack.c.h.b16 %v142
    %v496 = vunpack.c.l.b16 %v143
    %v497 = vunpack.c.h.b16 %v143
    %v498 = vunpack.c.l.b16 %v144
    %v499 = vunpack.c.h.b16 %v144
    %v500 = vunpack.c.l.b16 %v145
    %v501 = vunpack.c.h.b16 %v145
    %v502 = vunpack.c.l.b16 %v146
    %v503 = vunpack.c.h.b16 %v146
    %v504 = vunpack.c.l.b16 %v147
    %v505 = vunpack.c.h.b16 %v147
    %v506 = vunpack.c.l.b16 %v148
    %v507 = vunpack.c.h.b16 %v148
    %v508 = vunpack.c.l.b16 %v149
    %v509 = vunpack.c.h.b16 %v149
    %v510 = vunpack.c.l.b16 %v150
    %v511 = vunpack.c.h.b16 %v150
    %v512 = vunpack.c.l.b16 %v151
    %v513 = vunpack.c.h.b16 %v151
    %v514 = vunpack.c.l.b16 %v152
    %v515 = vunpack.c.h.b16 %v152
    %v516 = vunpack.c.l.b16 %v153
    %v517 = vunpack.c.h.b16 %v153
    %v518 = vunpack.c.l.b16 %v154
    %v519 = vunpack.c.h.b16 %v154
    %v520 = vunpack.c.l.b16 %v155
    %v521 = vunpack.c.h.b16 %v155
    %v522 = vunpack.c.l.b16 %v156
    %v523 = vunpack.c.h.b16 %v156
    %v524 = vunpack.c.l.b16 %v157
    %v525 = vunpack.c.h.b16 %v157
    %v526 = vunpack.c.l.b16 %v158
    %v527 = vunpack.c.h.b16 %v158
    %v528 = vunpack.c.l.b16 %v159
    %v529 = vunpack.c.h.b16 %v159
    %v530 = vunpack.c.l.b16 %v160
    %v531 = vunpack.c.h.b16 %v160
    %v532 = vunpack.c.l.b16 %v161
    %v533 = vunpack.c.h.b16 %v161
    %v534 = vunpack.c.l.b16 %v162
    %v535 = vunpack.c.h.b16 %v162
    %v536 = vunpack.c.l.b16 %v163
    %v537 = vunpack.c.h.b16 %v163
    %v538 = vunpack.c.l.b16 %v164
    %v539 = vunpack.c.h.b16 %v164
    %v540 = vunpack.c.l.b16 %v165
    %v541 = vunpack.c.h.b16 %v165
    %v542 = vunpack.c.l.b16 %v166
    %v543 = vunpack.c.h.b16 %v166
    %v544 = vunpack.c.l.b16 %v167
    %v545 = vunpack.c.h.b16 %v167
    %v546 = vunpack.c.l.b16 %v168
    %v547 = vunpack.c.h.b16 %v168
    %v548 = vunpack.c.l.b16 %v169
    %v549 = vunpack.c.h.b16 %v169
    %v550 = vunpack.c.l.b16 %v170
    %v551 = vunpack.c.h.b16 %v170
    %v552 = vunpack.c.l.b16 %v171
    %v553 = vunpack.c.h.b16 %v171
    %v554 = vunpack.c.l.b16 %v172
    %v555 = vunpack.c.h.b16 %v172
    %v556 = vunpack.c.l.b16 %v173
    %v557 = vunpack.c.h.b16 %v173
    %v558 = vunpack.c.l.b16 %v174
    %v559 = vunpack.c.h.b16 %v174
    %v560 = vunpack.c.l.b16 %v175
    %v561 = vunpack.c.h.b16 %v175
    %v562 = vunpack.c.l.b16 %v176
    %v563 = vunpack.c.h.b16 %v176
    %v564 = vunpack.c.l.b16 %v177
    %v565 = vunpack.c.h.b16 %v177
    %v566 = vunpack.c.l.b16 %v178
    %v567 = vunpack.c.h.b16 %v178
    %v568 = vunpack.c.l.b16 %v179
    %v569 = vunpack.c.h.b16 %v179
    %v570 = vunpack.c.l.b16 %v180
    %v571 = vunpack.c.h.b16 %v180
    %v572 = vunpack.c.l.b16 %v181
    %v573 = vunpack.c.h.b16 %v181
    %v574 = vunpack.c.l.b16 %v182
    %v575 = vunpack.c.h.b16 %v182
    %v576 = vunpack.c.l.b16 %v183
    %v577 = vunpack.c.h.b16 %v183
    %v578 = vunpack.c.l.b16 %v184
    %v579 = vunpack.c.h.b16 %v184
    %v580 = vunpack.c.l.b16 %v185
    %v581 = vunpack.c.h.b16 %v185
    %v582 = vunpack.c.l.b16 %v186
    %v583 = vunpack.c.h.b16 %v186
    %v584 = vunpack.c.l.b16 %v187
    %v585 = vunpack.c.h.b16 %v187
    %v586 = vunpack.c.l.b16 %v188
    %v587 = vunpack.c.h.b16 %v188
    %v588 = vunpack.c.l.b16 %v189
    %v589 = vunpack.c.h.b16 %v189
    %v590 = vunpack.c.l.b16 %v190
    %v591 = vunpack.c.h.b16 %v190
    %v592 = vunpack.c.l.b16 %v191
    %v593 = vunpack.c.h.b16 %v191
    %v594 = vunpack.c.l.b16 %v192
    %v595 = vunpack.c.h.b16 %v192
    %v596 = vunpack.c.l.b16 %v193
    %v597 = vunpack.c.h.b16 %v193
    %v598 = vunpack.c.l.b16 %v194
    %v599 = vunpack.c.h.b16 %v194
    %v600 = vunpack.c.l.b16 %v195
    %v601 = vunpack.c.h.b16 %v195
    %v602 = vunpack.c.l.b16 %v196
    %v603 = vunpack.c.h.b16 %v196
    %v604 = vunpack.c.l.b16 %v197
    %v605 = vunpack.c.h.b16 %v197
    %v606 = vunpack.c.l.b16 %v198
    %v607 = vunpack.c.h.b16 %v198
    %v608 = vunpack.c.l.b16 %v199
    %v609 = vunpack.c.h.b16 %v199
    %v610 = vunpack.c.l.b16 %v200
    %v611 = vunpack.c.h.b16 %v200
    %v612 = vunpack.c.l.b16 %v201
    %v613 = vunpack.c.h.b16 %v201
    %v614 = vunpack.c.l.b16 %v202
    %v615 = vunpack.c.h.b16 %v202
    %v616 = vunpack.c.l.b16 %v203
    %v617 = vunpack.c.h.b16 %v203
    %v618 = vunpack.c.l.b16 %v204
    %v619 = vunpack.c.h.b16 %v204
    %v620 = vunpack.c.l.b16 %v205
    %v621 = vunpack.c.h.b16 %v205
    %v622 = vunpack.c.l.b16 %v206
    %v623 = vunpack.c.h.b16 %v206
    %v624 = vunpack.c.l.b16 %v207
    %v625 = vunpack.c.h.b16 %v207
    %v626 = vunpack.c.l.b16 %v208
    %v627 = vunpack.c.h.b16 %v208
    %v628 = vunpack.c.l.b16 %v209
    %v629 = vunpack.c.h.b16 %v209
    %v630 = vunpack.c.l.b16 %v210
    %v631 = vunpack.c.h.b16 %v210
    %v632 = vunpack.c.l.b16 %v211
    %v633 = vunpack.c.h.b16 %v211
    %v634 = vunpack.c.l.b16 %v212
    %v635 = vunpack.c.h.b16 %v212
    %v636 = vunpack.c.l.b16 %v213
    %v637 = vunpack.c.h.b16 %v213
    %v638 = vunpack.c.l.b16 %v214
    %v639 = vunpack.c.h.b16 %v214
    %v640 = vunpack.c.l.b16 %v215
    %v641 = vunpack.c.h.b16 %v215
    %v642 = vpack.c.b16 %v394, %v386
    %v643 = vpack.c.b16 %v395, %v387
    %v644 = vpack.c.b16 %v396, %v388
    %v645 = vpack.c.b16 %v397, %v389
    %v646 = vpack.c.b16 %v398, %v390
    %v647 = vpack.c.b16 %v399, %v391
    %v648 = vpack.c.b16 %v400, %v392
    %v649 = vpack.c.b16 %v401, %v393
    %v650 = vpack.c.b16 %v410, %v402
    %v651 = vpack.c.b16 %v411, %v403
    %v652 = vpack.c.b16 %v412, %v404
    %v653 = vpack.c.b16 %v413, %v405
    %v654 = vpack.c.b16 %v414, %v406
    %v655 = vpack.c.b16 %v415, %v407
    %v656 = vpack.c.b16 %v416, %v408
    %v657 = vpack.c.b16 %v417, %v409
    %v658 = vpack.c.b16 %v426, %v418
    %v659 = vpack.c.b16 %v427, %v419
    %v660 = vpack.c.b16 %v428, %v420
    %v661 = vpack.c.b16 %v429, %v421
    %v662 = vpack.c.b16 %v430, %v422
    %v663 = vpack.c.b16 %v431, %v423
    %v664 = vpack.c.b16 %v432, %v424
    %v665 = vpack.c.b16 %v433, %v425
    %v666 = vpack.c.b16 %v442, %v434
    %v667 = vpack.c.b16 %v443, %v435
    %v668 = vpack.c.b16 %v444, %v436
    %v669 = vpack.c.b16 %v445, %v437
    %v670 = vpack.c.b16 %v446, %v438
    %v671 = vpack.c.b16 %v447, %v439
    %v672 = vpack.c.b16 %v448, %v440
    %v673 = vpack.c.b16 %v449, %v441
    %v674 = vpack.c.b16 %v458, %v450
    %v675 = vpack.c.b16 %v459, %v451
    %v676 = vpack.c.b16 %v460, %v452
    %v677 = vpack.c.b16 %v461, %v453
    %v678 = vpack.c.b16 %v462, %v454
    %v679 = vpack.c.b16 %v463, %v455
    %v680 = vpack.c.b16 %v464, %v456
    %v681 = vpack.c.b16 %v465, %v457
    %v682 = vpack.c.b16 %v474, %v466
    %v683 = vpack.c.b16 %v475, %v467
    %v684 = vpack.c.b16 %v476, %v468
    %v685 = vpack.c.b16 %v477, %v469
    %v686 = vpack.c.b16 %v478, %v470
    %v687 = vpack.c.b16 %v479, %v471
    %v688 = vpack.c.b16 %v480, %v472
    %v689 = vpack.c.b16 %v481, %v473
    %v690 = vpack.c.b16 %v490, %v482
    %v691 = vpack.c.b16 %v491, %v483
    %v692 = vpack.c.b16 %v492, %v484
    %v693 = vpack.c.b16 %v493, %v485
    %v694 = vpack.c.b16 %v494, %v486
    %v695 = vpack.c.b16 %v495, %v487
    %v696 = vpack.c.b16 %v496, %v488
    %v697 = vpack.c.b16 %v497, %v489
    %v698 = vpack.c.b16 %v506, %v498
    %v699 = vpack.c.b16 %v507, %v499
    %v700 = vpack.c.b16 %v508, %v500
    %v701 = vpack.c.b16 %v509, %v501
    %v702 = vpack.c.b16 %v510, %v502
    %v703 = vpack.c.b16 %v511, %v503
    %v704 = vpack.c.b16 %v512, %v504
    %v705 = vpack.c.b16 %v513, %v505
    %v706 = vpack.c.b16 %v522, %v514
    %v707 = vpack.c.b16 %v523, %v515
    %v708 = vpack.c.b16 %v524, %v516
    %v709 = vpack.c.b16 %v525, %v517
    %v710 = vpack.c.b16 %v526, %v518
    %v711 = vpack.c.b16 %v527, %v519
    %v712 = vpack.c.b16 %v528, %v520
    %v713 = vpack.c.b16 %v529, %v521
    %v714 = vpack.c.b16 %v538, %v530
    %v715 = vpack.c.b16 %v539, %v531
    %v716 = vpack.c.b16 %v540, %v532
    %v717 = vpack.c.b16 %v541, %v533
    %v718 = vpack.c.b16 %v542, %v534
    %v719 = vpack.c.b16 %v543, %v535
    %v720 = vpack.c.b16 %v544, %v536
    %v721 = vpack.c.b16 %v545, %v537
    %v722 = vpack.c.b16 %v554, %v546
    %v723 = vpack.c.b16 %v555, %v547
    %v724 = vpack.c.b16 %v556, %v548
    %v725 = vpack.c.b16 %v557, %v549
    %v726 = vpack.c.b16 %v558, %v550
    %v727 = vpack.c.b16 %v559, %v551
    %v728 = vpack.c.b16 %v560, %v552
    %v729 = vpack.c.b16 %v561, %v553
    %v730 = vpack.c.b16 %v570, %v562
    %v731 = vpack.c.b16 %v571, %v563
    %v732 = vpack.c.b16 %v572, %v564
    %v733 = vpack.c.b16 %v573, %v565
    %v734 = vpack.c.b16 %v574, %v566
    %v735 = vpack.c.b16 %v575, %v567
    %v736 = vpack.c.b16 %v576, %v568
    %v737 = vpack.c.b16 %v577, %v569
    %v738 = vpack.c.b16 %v586, %v578
    %v739 = vpack.c.b16 %v587, %v579
    %v740 = vpack.c.b16 %v588, %v580
    %v741 = vpack.c.b16 %v589, %v581
    %v742 = vpack.c.b16 %v590, %v582
    %v743 = vpack.c.b16 %v591, %v583
    %v744 = vpack.c.b16 %v592, %v584
    %v745 = vpack.c.b16 %v593, %v585
    %v746 = vpack.c.b16 %v602, %v594
    %v747 = vpack.c.b16 %v603, %v595
    %v748 = vpack.c.b16 %v604, %v596
    %v749 = vpack.c.b16 %v605, %v597
    %v750 = vpack.c.b16 %v606, %v598
    %v751 = vpack.c.b16 %v607, %v599
    %v752 = vpack.c.b16 %v608, %v600
    %v753 = vpack.c.b16 %v609, %v601
    %v754 = vpack.c.b16 %v618, %v610
    %v755 = vpack.c.b16 %v619, %v611
    %v756 = vpack.c.b16 %v620, %v612
    %v757 = vpack.c.b16 %v621, %v613
    %v758 = vpack.c.b16 %v622, %v614
    %v759 = vpack.c.b16 %v623, %v615
    %v760 = vpack.c.b16 %v624, %v616
    %v761 = vpack.c.b16 %v625, %v617
    %v762 = vpack.c.b16 %v634, %v626
    %v763 = vpack.c.b16 %v635, %v627
    %v764 = vpack.c.b16 %v636, %v628
    %v765 = vpack.c.b16 %v637, %v629
    %v766 = vpack.c.b16 %v638, %v630
    %v767 = vpack.c.b16 %v639, %v631
    %v768 = vpack.c.b16 %v640, %v632
    %v769 = vpack.c.b16 %v641, %v633
    %898 = vmatprep.subr.bf16.mxu0 %v643
    %899 = vmatpush1.bf16.msra.mxu0 %v642
    %900 = vmatprep.subr.bf16.mxu0 %v651
    %901 = vmatpush1.bf16.msra.mxu0 %v650
    %902 = vmatprep.subr.bf16.mxu0 %v659
    %903 = vmatpush1.bf16.msra.mxu0 %v658
    %904 = vmatprep.subr.bf16.mxu0 %v667
    %905 = vmatpush1.bf16.msra.mxu0 %v666
    %906 = vmatprep.subr.bf16.mxu0 %v675
    %907 = vmatpush1.bf16.msra.mxu0 %v674
    %908 = vmatprep.subr.bf16.mxu0 %v683
    %909 = vmatpush1.bf16.msra.mxu0 %v682
    %910 = vmatprep.subr.bf16.mxu0 %v691
    %911 = vmatpush1.bf16.msra.mxu0 %v690
    %912 = vmatprep.subr.bf16.mxu0 %v699
    %913 = vmatpush1.bf16.msra.mxu0 %v698
    %914 = vmatprep.subr.bf16.mxu0 %v707
    %915 = vmatpush1.bf16.msra.mxu0 %v706
    %916 = vmatprep.subr.bf16.mxu0 %v715
    %917 = vmatpush1.bf16.msra.mxu0 %v714
    %918 = vmatprep.subr.bf16.mxu0 %v723
    %919 = vmatpush1.bf16.msra.mxu0 %v722
    %920 = vmatprep.subr.bf16.mxu0 %v731
    %921 = vmatpush1.bf16.msra.mxu0 %v730
    %922 = vmatprep.subr.bf16.mxu0 %v739
    %923 = vmatpush1.bf16.msra.mxu0 %v738
    %924 = vmatprep.subr.bf16.mxu0 %v747
    %925 = vmatpush1.bf16.msra.mxu0 %v746
    %926 = vmatprep.subr.bf16.mxu0 %v755
    %927 = vmatpush1.bf16.msra.mxu0 %v754
    %928 = vmatprep.subr.bf16.mxu0 %v763
    %929 = vmatpush1.bf16.msra.mxu0 %v762
    %930 = vmatprep.mubr.bf16.mxu0 %v87
    %931 = vmatmul.mubr.bf16.gmra.mrb[0].mxu0 %v86
    %v932 = vpop.f32.mrb[0].mxu0
    %v933 = vadd.f32 %v221, %v932
    %v934 = vpop.f32.mrb[0].mxu0
    %v935 = vadd.f32 %v225, %v934
    %v936 = vpop.f32.mrb[0].mxu0
    %v937 = vpop.f32.mrb[0].mxu0
    %938 = vdwg.mxu0
    %939 = vmatprep.subr.bf16.mxu0 %v645
    %940 = vmatpush1.bf16.msra.mxu0 %v644
    %941 = vmatprep.subr.bf16.mxu0 %v653
    %942 = vmatpush1.bf16.msra.mxu0 %v652
    %943 = vmatprep.subr.bf16.mxu0 %v661
    %944 = vmatpush1.bf16.msra.mxu0 %v660
    %945 = vmatprep.subr.bf16.mxu0 %v669
    %946 = vmatpush1.bf16.msra.mxu0 %v668
    %947 = vmatprep.subr.bf16.mxu0 %v677
    %948 = vmatpush1.bf16.msra.mxu0 %v676
    %949 = vmatprep.subr.bf16.mxu0 %v685
    %950 = vmatpush1.bf16.msra.mxu0 %v684
    %951 = vmatprep.subr.bf16.mxu0 %v693
    %952 = vmatpush1.bf16.msra.mxu0 %v692
    %953 = vmatprep.subr.bf16.mxu0 %v701
    %954 = vmatpush1.bf16.msra.mxu0 %v700
    %955 = vmatprep.subr.bf16.mxu0 %v709
    %956 = vmatpush1.bf16.msra.mxu0 %v708
    %957 = vmatprep.subr.bf16.mxu0 %v717
    %958 = vmatpush1.bf16.msra.mxu0 %v716
    %959 = vmatprep.subr.bf16.mxu0 %v725
    %960 = vmatpush1.bf16.msra.mxu0 %v724
    %961 = vmatprep.subr.bf16.mxu0 %v733
    %962 = vmatpush1.bf16.msra.mxu0 %v732
    %963 = vmatprep.subr.bf16.mxu0 %v741
    %964 = vmatpush1.bf16.msra.mxu0 %v740
    %965 = vmatprep.subr.bf16.mxu0 %v749
    %966 = vmatpush1.bf16.msra.mxu0 %v748
    %967 = vmatprep.subr.bf16.mxu0 %v757
    %968 = vmatpush1.bf16.msra.mxu0 %v756
    %969 = vmatprep.subr.bf16.mxu0 %v765
    %970 = vmatpush1.bf16.msra.mxu0 %v764
    %971 = vmatprep.mubr.bf16.mxu0 %v87
    %972 = vmatmul.mubr.bf16.gmra.mrb[0].mxu0 %v86
    %v973 = vpop.f32.mrb[0].mxu0
    %v974 = vadd.f32 %v229, %v973
    %v975 = vpop.f32.mrb[0].mxu0
    %v976 = vadd.f32 %v233, %v975
    %v977 = vpop.f32.mrb[0].mxu0
    %v978 = vpop.f32.mrb[0].mxu0
    %979 = vdwg.mxu0
    %980 = vmatprep.subr.bf16.mxu0 %v647
    %981 = vmatpush1.bf16.msra.mxu0 %v646
    %982 = vmatprep.subr.bf16.mxu0 %v655
    %983 = vmatpush1.bf16.msra.mxu0 %v654
    %984 = vmatprep.subr.bf16.mxu0 %v663
    %985 = vmatpush1.bf16.msra.mxu0 %v662
    %986 = vmatprep.subr.bf16.mxu0 %v671
    %987 = vmatpush1.bf16.msra.mxu0 %v670
    %988 = vmatprep.subr.bf16.mxu0 %v679
    %989 = vmatpush1.bf16.msra.mxu0 %v678
    %990 = vmatprep.subr.bf16.mxu0 %v687
    %991 = vmatpush1.bf16.msra.mxu0 %v686
    %992 = vmatprep.subr.bf16.mxu0 %v695
    %993 = vmatpush1.bf16.msra.mxu0 %v694
    %994 = vmatprep.subr.bf16.mxu0 %v703
    %995 = vmatpush1.bf16.msra.mxu0 %v702
    %996 = vmatprep.subr.bf16.mxu0 %v711
    %997 = vmatpush1.bf16.msra.mxu0 %v710
    %998 = vmatprep.subr.bf16.mxu0 %v719
    %999 = vmatpush1.bf16.msra.mxu0 %v718
    %1000 = vmatprep.subr.bf16.mxu0 %v727
    %1001 = vmatpush1.bf16.msra.mxu0 %v726
    %1002 = vmatprep.subr.bf16.mxu0 %v735
    %1003 = vmatpush1.bf16.msra.mxu0 %v734
    %1004 = vmatprep.subr.bf16.mxu0 %v743
    %1005 = vmatpush1.bf16.msra.mxu0 %v742
    %1006 = vmatprep.subr.bf16.mxu0 %v751
    %1007 = vmatpush1.bf16.msra.mxu0 %v750
    %1008 = vmatprep.subr.bf16.mxu0 %v759
    %1009 = vmatpush1.bf16.msra.mxu0 %v758
    %1010 = vmatprep.subr.bf16.mxu0 %v767
    %1011 = vmatpush1.bf16.msra.mxu0 %v766
    %1012 = vmatprep.mubr.bf16.mxu0 %v87
    %1013 = vmatmul.mubr.bf16.gmra.mrb[0].mxu0 %v86
    %v1014 = vpop.f32.mrb[0].mxu0
    %v1015 = vadd.f32 %v237, %v1014
    %v1016 = vpop.f32.mrb[0].mxu0
    %v1017 = vadd.f32 %v241, %v1016
    %v1018 = vpop.f32.mrb[0].mxu0
    %v1019 = vpop.f32.mrb[0].mxu0
    %1020 = vdwg.mxu0
    %1021 = vmatprep.subr.bf16.mxu0 %v649
    %1022 = vmatpush1.bf16.msra.mxu0 %v648
    %1023 = vmatprep.subr.bf16.mxu0 %v657
    %1024 = vmatpush1.bf16.msra.mxu0 %v656
    %1025 = vmatprep.subr.bf16.mxu0 %v665
    %1026 = vmatpush1.bf16.msra.mxu0 %v664
    %1027 = vmatprep.subr.bf16.mxu0 %v673
    %1028 = vmatpush1.bf16.msra.mxu0 %v672
    %1029 = vmatprep.subr.bf16.mxu0 %v681
    %1030 = vmatpush1.bf16.msra.mxu0 %v680
    %1031 = vmatprep.subr.bf16.mxu0 %v689
    %1032 = vmatpush1.bf16.msra.mxu0 %v688
    %1033 = vmatprep.subr.bf16.mxu0 %v697
    %1034 = vmatpush1.bf16.msra.mxu0 %v696
    %1035 = vmatprep.subr.bf16.mxu0 %v705
    %1036 = vmatpush1.bf16.msra.mxu0 %v704
    %1037 = vmatprep.subr.bf16.mxu0 %v713
    %1038 = vmatpush1.bf16.msra.mxu0 %v712
    %1039 = vmatprep.subr.bf16.mxu0 %v721
    %1040 = vmatpush1.bf16.msra.mxu0 %v720
    %1041 = vmatprep.subr.bf16.mxu0 %v729
    %1042 = vmatpush1.bf16.msra.mxu0 %v728
    %1043 = vmatprep.subr.bf16.mxu0 %v737
    %1044 = vmatpush1.bf16.msra.mxu0 %v736
    %1045 = vmatprep.subr.bf16.mxu0 %v745
    %1046 = vmatpush1.bf16.msra.mxu0 %v744
    %1047 = vmatprep.subr.bf16.mxu0 %v753
    %1048 = vmatpush1.bf16.msra.mxu0 %v752
    %1049 = vmatprep.subr.bf16.mxu0 %v761
    %1050 = vmatpush1.bf16.msra.mxu0 %v760
    %1051 = vmatprep.subr.bf16.mxu0 %v769
    %1052 = vmatpush1.bf16.msra.mxu0 %v768
    %1053 = vmatprep.mubr.bf16.mxu0 %v87
    %1054 = vmatmul.mubr.bf16.gmra.mrb[0].mxu0 %v86
    %v1055 = vpop.f32.mrb[0].mxu0
    %v1056 = vadd.f32 %v245, %v1055
    %v1057 = vpop.f32.mrb[0].mxu0
    %v1058 = vadd.f32 %v249, %v1057
    %v1059 = vpop.f32.mrb[0].mxu0
    %v1060 = vpop.f32.mrb[0].mxu0
    %1061 = vdwg.mxu0
    %v1062 = vmax.f32 %v933, 0.0
    %v1063 = vmax.f32 %v935, 0.0
    %v1064 = vmax.f32 %v974, 0.0
    %v1065 = vmax.f32 %v976, 0.0
    %v1066 = vmax.f32 %v1015, 0.0
    %v1067 = vmax.f32 %v1017, 0.0
    %v1068 = vmax.f32 %v1056, 0.0
    %v1069 = vmax.f32 %v1058, 0.0
    %v1070 = vld [vmem:[%s4] sm:$0xff]
    %v1072 = vlaneseq
    %v1073 = vshrl.u32 %v1072, 7
    %v1074 = vsub.s32 0, %v1073
    %v1075 = vrot.slane %v1070, %v1074
    %v1076 = vlaneseq
    %v1077 = vshrl.u32 %v1076, 7
    %v1078 = vsub.s32 1, %v1077
    %v1079 = vrot.slane %v1070, %v1078
    %v1080 = vlaneseq
    %v1081 = vshrl.u32 %v1080, 7
    %v1082 = vsub.s32 2, %v1081
    %v1083 = vrot.slane %v1070, %v1082
    %v1084 = vlaneseq
    %v1085 = vshrl.u32 %v1084, 7
    %v1086 = vsub.s32 3, %v1085
    %v1087 = vrot.slane %v1070, %v1086
    %v1088 = vlaneseq
    %v1089 = vshrl.u32 %v1088, 7
    %v1090 = vsub.s32 4, %v1089
    %v1091 = vrot.slane %v1070, %v1090
    %v1092 = vlaneseq
    %v1093 = vshrl.u32 %v1092, 7
    %v1094 = vsub.s32 5, %v1093
    %v1095 = vrot.slane %v1070, %v1094
    %v1096 = vlaneseq
    %v1097 = vshrl.u32 %v1096, 7
    %v1098 = vsub.s32 6, %v1097
    %v1099 = vrot.slane %v1070, %v1098
    %v1100 = vlaneseq
    %v1101 = vshrl.u32 %v1100, 7
    %v1102 = vsub.s32 7, %v1101
    %v1103 = vrot.slane %v1070, %v1102
    %v1112 = vmul.f32 %v1062, %v1075
    %v1113 = vmul.f32 %v1063, %v1079
    %v1114 = vmul.f32 %v1064, %v1083
    %v1115 = vmul.f32 %v1065, %v1087
    %v1116 = vmul.f32 %v1066, %v1091
    %v1117 = vmul.f32 %v1067, %v1095
    %v1118 = vmul.f32 %v1068, %v1099
    %v1119 = vmul.f32 %v1069, %v1103
    %v1120 = vadd.f32 %v1112, %v1113
    %v1121 = vadd.f32 %v1120, %v1114
    %v1122 = vadd.f32 %v1121, %v1115
    %v1123 = vadd.f32 %v1122, %v1116
    %v1124 = vadd.f32 %v1123, %v1117
    %v1125 = vadd.f32 %v1124, %v1118
    %v1126 = vadd.f32 %v1125, %v1119
    %1127 = vadd.xlane.f32.xlu0 %v1126
    %v1128 = vpop.xlane.xlu0 %1127
    %v1129 = vld [vmem:[#allocation2] sm:$0x1]
    %v1131 = vlaneseq
    %v1132 = vshrl.u32 %v1131, 7
    %v1133 = vsub.s32 0, %v1132
    %v1134 = vrot.slane %v1129, %v1133
    %v1136 = vadd.f32 %v1128, %v1134
    %vm1137 = vcmask 7168
    %1138 = vst.msk [vmem:[%s6] sm:$0xff] %vm1137, %v1136
    // Predicated region
    $region38: #{tpu_custom_call.1} parent=1 // pred_check
      _
    $region39: #{tpu_custom_call.1} parent=1 // pred_check_branch
      %1140 = sbr.rel (0) target = $region41
    $region40: #{tpu_custom_call.1} parent=1 // pred_region
      _
    $region41: #{tpu_custom_call.1} parent=1 // pred_fallthru
      _
    // Predicated region
    $region42: #{tpu_custom_call.1} parent=1 // pred_check
      _
    $region43: #{tpu_custom_call.1} parent=1 // pred_check_branch
      %1142 = sbr.rel (0) target = $region45
    $region44: #{tpu_custom_call.1} parent=1 // pred_region
      _
    $region45: #{tpu_custom_call.1} parent=1 // pred_fallthru
      _
    %1143 = vsyncpa [#allocation4], 1
    %1144 = vsyncpa [#allocation6], 1

</llo_original>
